<compile_context>
chip_gen: v5e
topology: v5e:2x2
jax: 0.10.0
libtpu: 0.0.40
codegen_flags: <defaults>
</compile_context>

<pallas_src>
import functools

import jax
import jax.numpy as jnp
from jax.experimental import pallas as pl
from jax.experimental.pallas import tpu as pltpu


def _lstm_combiner_kernel(num_layers, hidden_dim,
                          x_ref, w_ref, b_ref, s0_ref,
                          out_ref, state_ref):
    """One grid step == one (head, modifier) token through Linear + L-layer LSTM.

    x_ref     : (1, 1, 2H)        streamed per token (f32)
    w_ref     : (L+1, 2H, 4H)     bf16, VMEM-resident (constant block index)
    b_ref     : (L+1, 1, 4H)      f32,  VMEM-resident
    s0_ref    : (2L, H)           f32,  initial packed [h0;c0] (row 2l=h_l, 2l+1=c_l)
    out_ref   : (1, 1, H)         per-token last-layer hidden
    state_ref : (2L, H)           carried recurrent state (VMEM-resident output,
                                  aliased onto the s0 HBM buffer)
    """
    L, H = num_layers, hidden_dim
    t = pl.program_id(0)

    # Initialize the carried state from the packed initial hidden at step 0.
    # The output block index is constant, so this VMEM buffer persists across
    # all grid steps and is only written back to HBM at the end.
    @pl.when(t == 0)
    def _():
        state_ref[...] = s0_ref[...]

    x = x_ref[0]                                            # (1, 2H) f32

    # "Layer 0" = fused concat + Linear(2E -> E): only the first H output
    # columns of the padded (2H, 4H) weight slice are live.
    g0 = jnp.dot(x.astype(jnp.bfloat16), w_ref[0],
                 preferred_element_type=jnp.float32)        # (1, 4H)
    temp = g0[:, :H] + b_ref[0][:, :H]                      # (1, H) f32

    for l in range(L):
        h_prev = state_ref[2 * l:2 * l + 1, :]              # (1, H)
        c_prev = state_ref[2 * l + 1:2 * l + 2, :]          # (1, H)

        # Single fused gate matmul: [x, h_prev] @ [W_ih^T ; W_hh^T] + (b_ih+b_hh)
        xh = jnp.concatenate([temp, h_prev], axis=-1)       # (1, 2H)
        gates = (jnp.dot(xh.astype(jnp.bfloat16), w_ref[l + 1],
                         preferred_element_type=jnp.float32)
                 + b_ref[l + 1])                            # (1, 4H) f32

        sig = jax.nn.sigmoid(gates)                         # one EUP pass, 4H lanes
        i_g = sig[:, 0 * H:1 * H]
        f_g = sig[:, 1 * H:2 * H]
        o_g = sig[:, 3 * H:4 * H]
        g_g = jnp.tanh(gates[:, 2 * H:3 * H])

        c_new = f_g * c_prev + i_g * g_g
        h_new = o_g * jnp.tanh(c_new)

        state_ref[2 * l:2 * l + 1, :] = h_new
        state_ref[2 * l + 1:2 * l + 2, :] = c_new
        temp = h_new                                        # input to next layer

    out_ref[0] = temp                                       # lstm_hiddens[-1]


def lstm_combiner_forward_sequence(heads, mods, packed_params, hidden):
    """Run T sequential combiner steps (the parse-loop TODO, hoisted in-kernel).

    heads, mods : (T, E)
    hidden      : (h0, c0), each (L, 1, E)   -- donated into the new state
    Returns (outs (T, E), (h_new (L,1,E), c_new (L,1,E))).
    """
    w_all, b_all = packed_params
    h0, c0 = hidden
    L, _, H = h0.shape
    T = heads.shape[0]

    x = jnp.concatenate([heads.reshape(T, -1), mods.reshape(T, -1)],
                        axis=-1).astype(jnp.float32).reshape(T, 1, 2 * H)
    state0 = jnp.concatenate([h0, c0], axis=1).reshape(2 * L, H).astype(jnp.float32)

    kernel = functools.partial(_lstm_combiner_kernel, L, H)

    outs, state_out = pl.pallas_call(
        kernel,
        out_shape=(
            jax.ShapeDtypeStruct((T, 1, H), jnp.float32),
            jax.ShapeDtypeStruct((2 * L, H), jnp.float32),
        ),
        grid=(T,),
        in_specs=[
            pl.BlockSpec((1, 1, 2 * H), lambda t: (t, 0, 0)),       # x, streamed
            pl.BlockSpec((L + 1, 2 * H, 4 * H), lambda t: (0, 0, 0)),  # weights, resident
            pl.BlockSpec((L + 1, 1, 4 * H), lambda t: (0, 0, 0)),   # biases, resident
            pl.BlockSpec((2 * L, H), lambda t: (0, 0)),             # initial state
        ],
        out_specs=(
            pl.BlockSpec((1, 1, H), lambda t: (t, 0, 0)),           # per-token output
            pl.BlockSpec((2 * L, H), lambda t: (0, 0)),             # final state
        ),
        # Recurrent state updated in place: state0 -> state_out.
        input_output_aliases={3: 1},
        compiler_params=pltpu.CompilerParams(
            dimension_semantics=("arbitrary",)),                    # recurrence
    )(x, w_all, b_all, state0)

    s = state_out.reshape(L, 2, H)
    return outs.reshape(T, H), (s[:, 0:1, :], s[:, 1:2, :])


def lstm_combiner_forward(head_embed, modifier_embed, packed_params, hidden):
    """Original module signature: one (head, modifier) pair -> (1, E) + new hidden."""
    out, new_hidden = lstm_combiner_forward_sequence(
        head_embed.reshape(1, -1), modifier_embed.reshape(1, -1),
        packed_params, hidden)
    return out, new_hidden


# ---------------------------------------------------------------------------
# Parameter construction (PyTorch layout) and one-time packing to kernel layout.
# ---------------------------------------------------------------------------

def make_params(key, embedding_dim, num_layers):
    """PyTorch-style parameters: Linear W (E, 2E), LSTM W_ih/W_hh (L, 4H, H)."""
    E, L, H = embedding_dim, num_layers, embedding_dim
    ks = jax.random.split(key, 6)
    s = 1.0 / jnp.sqrt(jnp.float32(H))
    wl = jax.random.uniform(ks[0], (E, 2 * E), jnp.float32, -s, s)
    bl = jax.random.uniform(ks[1], (1, E), jnp.float32, -s, s)
    wih = jax.random.uniform(ks[2], (L, 4 * H, H), jnp.float32, -s, s)
    whh = jax.random.uniform(ks[3], (L, 4 * H, H), jnp.float32, -s, s)
    bih = jax.random.uniform(ks[4], (L, 1, 4 * H), jnp.float32, -s, s)
    bhh = jax.random.uniform(ks[5], (L, 1, 4 * H), jnp.float32, -s, s)
    return wl, bl, wih, whh, bih, bhh


def pack_params(wl, bl, wih, whh, bih, bhh):
    """One-time conversion to kernel layout.

    Weight slab (L+1, 2H, 4H) bf16:
      slice 0      : Linear W^T zero-padded into the first H output columns
      slice 1..L   : [W_ih^T ; W_hh^T] stacked along K (rows 0..H-1 multiply x,
                     rows H..2H-1 multiply h_prev)
    Bias slab (L+1, 1, 4H) f32: slice 0 = Linear bias (padded), 1..L = b_ih+b_hh.
    """
    E = wl.shape[0]
    H = E
    L = wih.shape[0]

    w0 = jnp.zeros((2 * H, 4 * H), jnp.float32).at[:, :H].set(wl.T)
    wih_t = jnp.transpose(wih, (0, 2, 1))                 # (L, H, 4H)
    whh_t = jnp.transpose(whh, (0, 2, 1))                 # (L, H, 4H)
    w_layers = jnp.concatenate([wih_t, whh_t], axis=1)    # (L, 2H, 4H)
    w_all = jnp.concatenate([w0[None], w_layers], axis=0).astype(jnp.bfloat16)

    b0 = jnp.zeros((1, 4 * H), jnp.float32).at[:, :H].set(bl)
    b_lstm = bih + bhh                                    # pre-summed biases
    b_all = jnp.concatenate([b0[None], b_lstm], axis=0).astype(jnp.float32)

    return w_all, b_all


def init_hidden(num_layers, hidden_dim, batch_size=1):
    h0 = jnp.zeros((num_layers, batch_size, hidden_dim), jnp.float32)
    c0 = jnp.zeros((num_layers, batch_size, hidden_dim), jnp.float32)
    return h0, c0


# ---------------------------------------------------------------------------
# Pure-JAX reference (PyTorch-layout params) for a correctness check.
# ---------------------------------------------------------------------------

def reference_forward(head_embed, modifier_embed, params, hidden):
    wl, bl, wih, whh, bih, bhh = params
    h0, c0 = hidden
    E = wl.shape[0]
    L = wih.shape[0]
    H = E
    x = jnp.concatenate(
        [head_embed.reshape(1, -1), modifier_embed.reshape(1, -1)], axis=-1)
    temp = x @ wl.T + bl
    h_list, c_list = [], []
    for l in range(L):
        gates = temp @ wih[l].T + bih[l] + h0[l] @ whh[l].T + bhh[l]
        i_g = jax.nn.sigmoid(gates[:, 0 * H:1 * H])
        f_g = jax.nn.sigmoid(gates[:, 1 * H:2 * H])
        g_g = jnp.tanh(gates[:, 2 * H:3 * H])
        o_g = jax.nn.sigmoid(gates[:, 3 * H:4 * H])
        c = f_g * c0[l] + i_g * g_g
        h = o_g * jnp.tanh(c)
        h_list.append(h)
        c_list.append(c)
        temp = h
    return temp, (jnp.stack(h_list), jnp.stack(c_list))


if __name__ == "__main__":
    EMBEDDING_DIM = 32
    NUM_LAYERS = 2
    NUM_TOKENS = 8          # parse-loop steps hoisted into one kernel launch

    key = jax.random.PRNGKey(0)
    kp, kh, km = jax.random.split(key, 3)

    params = make_params(kp, EMBEDDING_DIM, NUM_LAYERS)
    packed = pack_params(*params)
    hidden = init_hidden(NUM_LAYERS, EMBEDDING_DIM)

    heads = jax.random.normal(kh, (NUM_TOKENS, EMBEDDING_DIM), jnp.float32)
    mods = jax.random.normal(km, (NUM_TOKENS, EMBEDDING_DIM), jnp.float32)

    # Reference: NUM_TOKENS sequential calls of the original stateful forward.
    ref_outs = []
    ref_hidden = hidden
    for t in range(NUM_TOKENS):
        o, ref_hidden = reference_forward(
            heads[t:t + 1], mods[t:t + 1], params, ref_hidden)
        ref_outs.append(o)
    ref_outs = jnp.concatenate(ref_outs, axis=0)
    jax.block_until_ready((ref_outs, ref_hidden))

    # Pallas kernel: whole token loop in one launch, weights VMEM-resident.
    outs, new_hidden = lstm_combiner_forward_sequence(heads, mods, packed, hidden)
    jax.block_until_ready((outs, new_hidden))

    assert outs.shape == (NUM_TOKENS, EMBEDDING_DIM)
    assert new_hidden[0].shape == (NUM_LAYERS, 1, EMBEDDING_DIM)
    assert new_hidden[1].shape == (NUM_LAYERS, 1, EMBEDDING_DIM)
    # bf16 weights on the MXU (f32 accumulate, f32 gate math) -> slightly looser tol.
    assert jnp.allclose(outs, ref_outs, rtol=2e-2, atol=2e-2)
    assert jnp.allclose(new_hidden[0], ref_hidden[0], rtol=2e-2, atol=2e-2)
    assert jnp.allclose(new_hidden[1], ref_hidden[1], rtol=2e-2, atol=2e-2)

    # Original single-pair module signature (degenerate T=1 case).
    fresh = init_hidden(NUM_LAYERS, EMBEDDING_DIM)
    out1, _ = lstm_combiner_forward(heads[0], mods[0], packed, fresh)
    ref1, _ = reference_forward(heads[0:1], mods[0:1], params,
                                init_hidden(NUM_LAYERS, EMBEDDING_DIM))
    jax.block_until_ready((out1, ref1))
    assert out1.shape == (1, EMBEDDING_DIM)
    assert jnp.allclose(out1, ref1, rtol=2e-2, atol=2e-2)

    print("KERNEL_OK")
</pallas_src>

<mosaic_0001>
module attributes {stable_mosaic.version = 11 : i64} {
  func.func @_lstm_combiner_kernel(%arg0: i32, %arg1: memref<1x1x64xf32, #tpu.memory_space<vmem>>, %arg2: memref<3x64x128xbf16, #tpu.memory_space<vmem>>, %arg3: memref<3x1x128xf32, #tpu.memory_space<vmem>>, %arg4: memref<4x32xf32, #tpu.memory_space<vmem>>, %arg5: memref<1x1x32xf32, #tpu.memory_space<vmem>>, %arg6: memref<4x32xf32, #tpu.memory_space<vmem>>) attributes {dimension_semantics = [#tpu.dimension_semantics<arbitrary>], iteration_bounds = array<i64: 8>, scalar_prefetch = 0 : i64, scratch_operands = 0 : i64, tpu.core_type = #tpu.core_type<tc>, window_params = [{transform_indices = @transform_0, window_bounds = array<i64: 1, 1, 64>}, {pipeline_mode = #tpu.pipeline_mode<synchronous>, transform_indices = @transform_1, window_bounds = array<i64: 3, 64, 128>}, {pipeline_mode = #tpu.pipeline_mode<synchronous>, transform_indices = @transform_2, window_bounds = array<i64: 3, 1, 128>}, {pipeline_mode = #tpu.pipeline_mode<synchronous>, transform_indices = @transform_3, window_bounds = array<i64: 4, 32>}, {transform_indices = @transform_4, window_bounds = array<i64: 1, 1, 32>}, {pipeline_mode = #tpu.pipeline_mode<synchronous>, transform_indices = @transform_5, window_bounds = array<i64: 4, 32>}]} {
    %c0_i32 = arith.constant 0 : i32
    %0 = arith.cmpi eq, %arg0, %c0_i32 : i32
    %1 = arith.extui %0 : i1 to i32
    %c0_i32_0 = arith.constant 0 : i32
    %2 = arith.cmpi ne, %1, %c0_i32_0 : i32
    scf.if %2 {
      %c0_41 = arith.constant 0 : index
      %c0_42 = arith.constant 0 : index
      %71 = vector.load %arg4[%c0_41, %c0_42] : memref<4x32xf32, #tpu.memory_space<vmem>>, vector<4x32xf32>
      %c0_43 = arith.constant 0 : index
      %c0_44 = arith.constant 0 : index
      %72 = vector.load %arg6[%c0_43, %c0_44] : memref<4x32xf32, #tpu.memory_space<vmem>>, vector<4x32xf32>
      tpu.vector_store %arg6[%c0_43, %c0_44], %71 {strides = array<i32>} : memref<4x32xf32, #tpu.memory_space<vmem>>, vector<4x32xf32>,
    } else {
    }
    %c0 = arith.constant 0 : index
    %c0_1 = arith.constant 0 : index
    %c0_2 = arith.constant 0 : index
    %3 = vector.load %arg1[%c0, %c0_1, %c0_2] : memref<1x1x64xf32, #tpu.memory_space<vmem>>, vector<1x1x64xf32>
    %4 = vector.shape_cast %3 : vector<1x1x64xf32> to vector<1x64xf32>
    %5 = arith.truncf %4 : vector<1x64xf32> to vector<1x64xbf16>
    %c0_3 = arith.constant 0 : index
    %c0_4 = arith.constant 0 : index
    %c0_5 = arith.constant 0 : index
    %6 = vector.load %arg2[%c0_3, %c0_4, %c0_5] : memref<3x64x128xbf16, #tpu.memory_space<vmem>>, vector<1x64x128xbf16>
    %7 = vector.shape_cast %6 : vector<1x64x128xbf16> to vector<64x128xbf16>
    %cst = arith.constant dense<0.000000e+00> : vector<1x128xf32>
    %8 = tpu.matmul %5, %7, %cst {dimension_numbers = #tpu.dot_dimension_numbers<[1], [0], [0], [1], [0, 0, 1, 1], [], []>} : vector<1x64xbf16>, vector<64x128xbf16>, vector<1x128xf32> -> vector<1x128xf32>
    %9 = vector.extract_strided_slice %8 {offsets = [0, 0], sizes = [1, 32], strides = [1, 1]} : vector<1x128xf32> to vector<1x32xf32>
    %c0_6 = arith.constant 0 : index
    %c0_7 = arith.constant 0 : index
    %c0_8 = arith.constant 0 : index
    %10 = vector.load %arg3[%c0_6, %c0_7, %c0_8] : memref<3x1x128xf32, #tpu.memory_space<vmem>>, vector<1x1x128xf32>
    %11 = vector.shape_cast %10 : vector<1x1x128xf32> to vector<1x128xf32>
    %12 = vector.extract_strided_slice %11 {offsets = [0, 0], sizes = [1, 32], strides = [1, 1]} : vector<1x128xf32> to vector<1x32xf32>
    %13 = arith.addf %9, %12 : vector<1x32xf32>
    %c0_9 = arith.constant 0 : index
    %c0_10 = arith.constant 0 : index
    %14 = vector.load %arg6[%c0_9, %c0_10] : memref<4x32xf32, #tpu.memory_space<vmem>>, vector<1x32xf32>
    %c1 = arith.constant 1 : index
    %c0_11 = arith.constant 0 : index
    %15 = vector.load %arg6[%c1, %c0_11] : memref<4x32xf32, #tpu.memory_space<vmem>>, vector<1x32xf32>
    %16 = tpu.concatenate %13, %14 in 1 : vector<1x32xf32>, vector<1x32xf32> -> vector<1x64xf32>
    %17 = arith.truncf %16 : vector<1x64xf32> to vector<1x64xbf16>
    %c1_12 = arith.constant 1 : index
    %c0_13 = arith.constant 0 : index
    %c0_14 = arith.constant 0 : index
    %18 = vector.load %arg2[%c1_12, %c0_13, %c0_14] : memref<3x64x128xbf16, #tpu.memory_space<vmem>>, vector<1x64x128xbf16>
    %19 = vector.shape_cast %18 : vector<1x64x128xbf16> to vector<64x128xbf16>
    %cst_15 = arith.constant dense<0.000000e+00> : vector<1x128xf32>
    %20 = tpu.matmul %17, %19, %cst_15 {dimension_numbers = #tpu.dot_dimension_numbers<[1], [0], [0], [1], [0, 0, 1, 1], [], []>} : vector<1x64xbf16>, vector<64x128xbf16>, vector<1x128xf32> -> vector<1x128xf32>
    %c1_16 = arith.constant 1 : index
    %c0_17 = arith.constant 0 : index
    %c0_18 = arith.constant 0 : index
    %21 = vector.load %arg3[%c1_16, %c0_17, %c0_18] : memref<3x1x128xf32, #tpu.memory_space<vmem>>, vector<1x1x128xf32>
    %22 = vector.shape_cast %21 : vector<1x1x128xf32> to vector<1x128xf32>
    %23 = arith.addf %20, %22 : vector<1x128xf32>
    %24 = arith.negf %23 : vector<1x128xf32>
    %25 = math.exp %24 : vector<1x128xf32>
    %cst_19 = arith.constant 1.000000e+00 : f32
    %26 = vector.broadcast %cst_19 : f32 to vector<1x128xf32>
    %27 = arith.addf %26, %25 : vector<1x128xf32>
    %28 = arith.divf %26, %27 : vector<1x128xf32>
    %29 = vector.extract_strided_slice %28 {offsets = [0, 0], sizes = [1, 32], strides = [1, 1]} : vector<1x128xf32> to vector<1x32xf32>
    %30 = vector.extract_strided_slice %28 {offsets = [0, 32], sizes = [1, 32], strides = [1, 1]} : vector<1x128xf32> to vector<1x32xf32>
    %31 = vector.extract_strided_slice %28 {offsets = [0, 96], sizes = [1, 32], strides = [1, 1]} : vector<1x128xf32> to vector<1x32xf32>
    %32 = vector.extract_strided_slice %23 {offsets = [0, 64], sizes = [1, 32], strides = [1, 1]} : vector<1x128xf32> to vector<1x32xf32>
    %33 = math.tanh %32 : vector<1x32xf32>
    %34 = arith.mulf %30, %15 : vector<1x32xf32>
    %35 = arith.mulf %29, %33 : vector<1x32xf32>
    %36 = arith.addf %34, %35 : vector<1x32xf32>
    %37 = math.tanh %36 : vector<1x32xf32>
    %38 = arith.mulf %31, %37 : vector<1x32xf32>
    %c0_20 = arith.constant 0 : index
    %c0_21 = arith.constant 0 : index
    %39 = vector.load %arg6[%c0_20, %c0_21] : memref<4x32xf32, #tpu.memory_space<vmem>>, vector<1x32xf32>
    tpu.vector_store %arg6[%c0_20, %c0_21], %38 {strides = array<i32>} : memref<4x32xf32, #tpu.memory_space<vmem>>, vector<1x32xf32>,
    %c1_22 = arith.constant 1 : index
    %c0_23 = arith.constant 0 : index
    %40 = vector.load %arg6[%c1_22, %c0_23] : memref<4x32xf32, #tpu.memory_space<vmem>>, vector<1x32xf32>
    tpu.vector_store %arg6[%c1_22, %c0_23], %36 {strides = array<i32>} : memref<4x32xf32, #tpu.memory_space<vmem>>, vector<1x32xf32>,
    %c2 = arith.constant 2 : index
    %c0_24 = arith.constant 0 : index
    %41 = vector.load %arg6[%c2, %c0_24] : memref<4x32xf32, #tpu.memory_space<vmem>>, vector<1x32xf32>
    %c3 = arith.constant 3 : index
    %c0_25 = arith.constant 0 : index
    %42 = vector.load %arg6[%c3, %c0_25] : memref<4x32xf32, #tpu.memory_space<vmem>>, vector<1x32xf32>
    %43 = tpu.concatenate %38, %41 in 1 : vector<1x32xf32>, vector<1x32xf32> -> vector<1x64xf32>
    %44 = arith.truncf %43 : vector<1x64xf32> to vector<1x64xbf16>
    %c2_26 = arith.constant 2 : index
    %c0_27 = arith.constant 0 : index
    %c0_28 = arith.constant 0 : index
    %45 = vector.load %arg2[%c2_26, %c0_27, %c0_28] : memref<3x64x128xbf16, #tpu.memory_space<vmem>>, vector<1x64x128xbf16>
    %46 = vector.shape_cast %45 : vector<1x64x128xbf16> to vector<64x128xbf16>
    %cst_29 = arith.constant dense<0.000000e+00> : vector<1x128xf32>
    %47 = tpu.matmul %44, %46, %cst_29 {dimension_numbers = #tpu.dot_dimension_numbers<[1], [0], [0], [1], [0, 0, 1, 1], [], []>} : vector<1x64xbf16>, vector<64x128xbf16>, vector<1x128xf32> -> vector<1x128xf32>
    %c2_30 = arith.constant 2 : index
    %c0_31 = arith.constant 0 : index
    %c0_32 = arith.constant 0 : index
    %48 = vector.load %arg3[%c2_30, %c0_31, %c0_32] : memref<3x1x128xf32, #tpu.memory_space<vmem>>, vector<1x1x128xf32>
    %49 = vector.shape_cast %48 : vector<1x1x128xf32> to vector<1x128xf32>
    %50 = arith.addf %47, %49 : vector<1x128xf32>
    %51 = arith.negf %50 : vector<1x128xf32>
    %52 = math.exp %51 : vector<1x128xf32>
    %cst_33 = arith.constant 1.000000e+00 : f32
    %53 = vector.broadcast %cst_33 : f32 to vector<1x128xf32>
    %54 = arith.addf %53, %52 : vector<1x128xf32>
    %55 = arith.divf %53, %54 : vector<1x128xf32>
    %56 = vector.extract_strided_slice %55 {offsets = [0, 0], sizes = [1, 32], strides = [1, 1]} : vector<1x128xf32> to vector<1x32xf32>
    %57 = vector.extract_strided_slice %55 {offsets = [0, 32], sizes = [1, 32], strides = [1, 1]} : vector<1x128xf32> to vector<1x32xf32>
    %58 = vector.extract_strided_slice %55 {offsets = [0, 96], sizes = [1, 32], strides = [1, 1]} : vector<1x128xf32> to vector<1x32xf32>
    %59 = vector.extract_strided_slice %50 {offsets = [0, 64], sizes = [1, 32], strides = [1, 1]} : vector<1x128xf32> to vector<1x32xf32>
    %60 = math.tanh %59 : vector<1x32xf32>
    %61 = arith.mulf %57, %42 : vector<1x32xf32>
    %62 = arith.mulf %56, %60 : vector<1x32xf32>
    %63 = arith.addf %61, %62 : vector<1x32xf32>
    %64 = math.tanh %63 : vector<1x32xf32>
    %65 = arith.mulf %58, %64 : vector<1x32xf32>
    %c2_34 = arith.constant 2 : index
    %c0_35 = arith.constant 0 : index
    %66 = vector.load %arg6[%c2_34, %c0_35] : memref<4x32xf32, #tpu.memory_space<vmem>>, vector<1x32xf32>
    tpu.vector_store %arg6[%c2_34, %c0_35], %65 {strides = array<i32>} : memref<4x32xf32, #tpu.memory_space<vmem>>, vector<1x32xf32>,
    %c3_36 = arith.constant 3 : index
    %c0_37 = arith.constant 0 : index
    %67 = vector.load %arg6[%c3_36, %c0_37] : memref<4x32xf32, #tpu.memory_space<vmem>>, vector<1x32xf32>
    tpu.vector_store %arg6[%c3_36, %c0_37], %63 {strides = array<i32>} : memref<4x32xf32, #tpu.memory_space<vmem>>, vector<1x32xf32>,
    %c0_38 = arith.constant 0 : index
    %c0_39 = arith.constant 0 : index
    %c0_40 = arith.constant 0 : index
    %68 = vector.load %arg5[%c0_38, %c0_39, %c0_40] : memref<1x1x32xf32, #tpu.memory_space<vmem>>, vector<1x1x32xf32>
    %69 = vector.shape_cast %68 : vector<1x1x32xf32> to vector<1x32xf32>
    %70 = vector.shape_cast %65 : vector<1x32xf32> to vector<1x1x32xf32>
    tpu.vector_store %arg5[%c0_38, %c0_39, %c0_40], %70 {strides = array<i32>} : memref<1x1x32xf32, #tpu.memory_space<vmem>>, vector<1x1x32xf32>,
    return
  }
  func.func @transform_0(%arg0: i32) -> (i32, i32, i32) {
    %c0_i32 = arith.constant 0 : i32
    %c0_i32_0 = arith.constant 0 : i32
    %c0_i32_1 = arith.constant 0 : i32
    return %arg0, %c0_i32, %c0_i32_0 : i32, i32, i32
  }
  func.func @transform_1(%arg0: i32) -> (i32, i32, i32) {
    %c0_i32 = arith.constant 0 : i32
    %c0_i32_0 = arith.constant 0 : i32
    %c0_i32_1 = arith.constant 0 : i32
    %c0_i32_2 = arith.constant 0 : i32
    return %c0_i32, %c0_i32_0, %c0_i32_1 : i32, i32, i32
  }
  func.func @transform_2(%arg0: i32) -> (i32, i32, i32) {
    %c0_i32 = arith.constant 0 : i32
    %c0_i32_0 = arith.constant 0 : i32
    %c0_i32_1 = arith.constant 0 : i32
    %c0_i32_2 = arith.constant 0 : i32
    return %c0_i32, %c0_i32_0, %c0_i32_1 : i32, i32, i32
  }
  func.func @transform_3(%arg0: i32) -> (i32, i32) {
    %c0_i32 = arith.constant 0 : i32
    %c0_i32_0 = arith.constant 0 : i32
    %c0_i32_1 = arith.constant 0 : i32
    return %c0_i32, %c0_i32_0 : i32, i32
  }
  func.func @transform_4(%arg0: i32) -> (i32, i32, i32) {
    %c0_i32 = arith.constant 0 : i32
    %c0_i32_0 = arith.constant 0 : i32
    %c0_i32_1 = arith.constant 0 : i32
    return %arg0, %c0_i32, %c0_i32_0 : i32, i32, i32
  }
  func.func @transform_5(%arg0: i32) -> (i32, i32) {
    %c0_i32 = arith.constant 0 : i32
    %c0_i32_0 = arith.constant 0 : i32
    %c0_i32_1 = arith.constant 0 : i32
    return %c0_i32, %c0_i32_0 : i32, i32
  }
}

</mosaic_0001>

<llo_original>
// kernel: tpu_custom_call.1
$region0: #{tpu_custom_call.1}
  #allocation0 [shape = 'u32[]', space=smem, size = 0x4, offset = 0x4, fixed_abs, tag = 'smem constant byte address 0x4 - core index']
  #allocation1 [shape = 'u32[72,128]{1,0:T(1,128)}', space=vmem, size = 0x9000, scoped, tag = 'internal scratch']
  %s0 = inlined_call_operand.vmem [shape: f32[8,1,64], index: 0, kind: input, shape index: {}]
  %s1 = inlined_call_operand.hbm [shape: bf16[3,64,128], index: 1, kind: input, shape index: {}]
  %s2 = inlined_call_operand.hbm [shape: f32[3,1,128], index: 2, kind: input, shape index: {}]
  %s3 = inlined_call_operand.hbm [shape: f32[4,32], index: 3, kind: input, shape index: {}, may-alias: {3,5}]
  %s4 = inlined_call_operand.hbm [shape: f32[8,1,32], index: 4, kind: output, shape index: {0}]
  %s5 = inlined_call_operand.hbm [shape: f32[4,32], index: 5, kind: output, shape index: {1}, may-alias: {3,5}]
  %6 = xla_tuple %s4, %s5
  %s7 = sld [smem:[#allocation0]]
  $region73: #{tpu_custom_call.1} parent=0
    _
  %s9 = ssub.s32 1, %s7
  %s10 = scalar_select 0, %s9, %s7
  $region1: #{tpu_custom_call.1} parent=0
    #allocation2 [shape = 'u8[49152]{0}', space=vmem, size = 0xc000, scoped, tag = 'input window, operand 1, single buffered']
    #allocation3 [shape = 's32[2]{0}', space=sflag, size = 0x8, scoped, tag = 'scoped memory for tpu_custom_call.1']
    #allocation4 [shape = 's32[2]{0}', space=sflag, size = 0x8, scoped, tag = 'scoped memory for tpu_custom_call.1']
    #allocation5 [shape = 'u8[1536]{0}', space=vmem, size = 0x800, scoped, tag = 'input window, operand 2, single buffered']
    #allocation6 [shape = 's32[1]{0}', space=sflag, size = 0x4, scoped, tag = 'scoped memory for tpu_custom_call.1']
    #allocation7 [shape = 'u8[2048]{0}', space=vmem, size = 0x800, scoped, tag = 'input window, operand 3, single buffered']
    #allocation8 [shape = 'u8[1024]{0}', space=vmem, size = 0x400, scoped, tag = 'output window, operand 0']
    #allocation9 [shape = 'u8[2048]{0}', space=vmem, size = 0x800, scoped, tag = 'output window, operand 1, single buffered']
    #allocation10 [shape = 's32[1]{0}', space=sflag, size = 0x4, scoped, tag = 'scoped memory for tpu_custom_call.1']
    %11 = vsyncpa [#allocation3], 0
    %12 = vsyncpa [#allocation6], 0
    %13 = vsyncpa [#allocation4], 0
    %s14 = scalar_lea.sflag [#allocation4], 1
    %15 = vsyncpa %s14, 0
    %16 = vsyncpa [#allocation10], 0
    loop: start=0, step=1, limit=10
    $region2: #{tpu_custom_call.1} parent=1 // loop_pre_header
      _
    $region3: #{tpu_custom_call.1} parent=1 // loop_header
      %s18 = sphi 0, %s22
      %p19 = scmp.ge.s32.totalorder %s18, 10
      %s28 = sphi 0, %s30
      %s31 = sphi 0, %s28
      %s32 = sphi 0, %s31
      %s48 = sphi 0, %s32
      %s52 = sphi 0, %s52
      %s54 = sphi 0, %s52
      %s55 = sphi 0, %s54
      %s69 = sphi 0, %s55
      %s73 = sphi 0, %s73
      %s75 = sphi 0, %s73
      %s76 = sphi 0, %s75
      %s90 = sphi 0, %s76
      %s94 = sphi 0, %s94
      %s96 = sphi 0, %s94
      %s97 = sphi 0, %s96
      %s111 = sphi 0, %s97
      %s117 = sphi 0, %s119
      %s120 = sphi 0, %s117
      %s121 = sphi 0, %s120
      %s137 = sphi 0, %s121
      %s141 = sphi 0, %s141
      %s143 = sphi 0, %s141
      %s144 = sphi 0, %s143
      %s158 = sphi 0, %s144
    $region4: #{tpu_custom_call.1} parent=1 // loop_header_branch
      %21 = sbr.rel (%p19) target = $region8
    $region5: #{tpu_custom_call.1} parent=1 // loop_body
      %s23 = ssub.s32 %s18, 1
      %s24 = ssub.s32 %s18, 2
      %s25 = sadd.s32 %s18, 1
      %s26 = ssub.s32 %s18, %s25
      %p27 = scmp.eq.s32.totalorder %s26, 0
      %s29 = sadd.s32 %s28, 1
      %s30 = scalar_select %p27, %s28, %s29
      %p33 = pneg %p27
      %p34 = scmp.eq.s32.totalorder %s18, 7
      %p35 = por %p33, %p34
      %p36 = scmp.ne.s32.totalorder %s28, %s31
      %p37 = scmp.eq.s32.totalorder %s18, 0
      %p38 = por %p36, %p37
      %p39 = scmp.ne.s32.totalorder %s28, %s31
      %p40 = scmp.eq.s32.totalorder %s23, 7
      %p41 = por %p39, %p40
      %p42 = scmp.ne.s32.totalorder %s31, %s32
      %p43 = scmp.eq.s32.totalorder %s23, 0
      %p44 = por %p42, %p43
      %p45 = scmp.ne.s32.totalorder %s31, %s32
      %p46 = scmp.eq.s32.totalorder %s24, 7
      %p47 = por %p45, %p46
      %p49 = scmp.ne.s32.totalorder %s32, %s48
      %p50 = scmp.eq.s32.totalorder %s24, 0
      %p51 = por %p49, %p50
      %s53 = sadd.s32 %s52, 1
      %p56 = scmp.eq.s32.totalorder %s18, 7
      %p57 = scmp.ne.s32.totalorder %s52, %s54
      %p58 = scmp.eq.s32.totalorder %s18, 0
      %p59 = por %p57, %p58
      %p60 = scmp.ne.s32.totalorder %s52, %s54
      %p61 = scmp.eq.s32.totalorder %s23, 7
      %p62 = por %p60, %p61
      %p63 = scmp.ne.s32.totalorder %s54, %s55
      %p64 = scmp.eq.s32.totalorder %s23, 0
      %p65 = por %p63, %p64
      %p66 = scmp.ne.s32.totalorder %s54, %s55
      %p67 = scmp.eq.s32.totalorder %s24, 7
      %p68 = por %p66, %p67
      %p70 = scmp.ne.s32.totalorder %s55, %s69
      %p71 = scmp.eq.s32.totalorder %s24, 0
      %p72 = por %p70, %p71
      %s74 = sadd.s32 %s73, 1
      %p77 = scmp.eq.s32.totalorder %s18, 7
      %p78 = scmp.ne.s32.totalorder %s73, %s75
      %p79 = scmp.eq.s32.totalorder %s18, 0
      %p80 = por %p78, %p79
      %p81 = scmp.ne.s32.totalorder %s73, %s75
      %p82 = scmp.eq.s32.totalorder %s23, 7
      %p83 = por %p81, %p82
      %p84 = scmp.ne.s32.totalorder %s75, %s76
      %p85 = scmp.eq.s32.totalorder %s23, 0
      %p86 = por %p84, %p85
      %p87 = scmp.ne.s32.totalorder %s75, %s76
      %p88 = scmp.eq.s32.totalorder %s24, 7
      %p89 = por %p87, %p88
      %p91 = scmp.ne.s32.totalorder %s76, %s90
      %p92 = scmp.eq.s32.totalorder %s24, 0
      %p93 = por %p91, %p92
      %s95 = sadd.s32 %s94, 1
      %p98 = scmp.eq.s32.totalorder %s18, 7
      %p99 = scmp.ne.s32.totalorder %s94, %s96
      %p100 = scmp.eq.s32.totalorder %s18, 0
      %p101 = por %p99, %p100
      %p102 = scmp.ne.s32.totalorder %s94, %s96
      %p103 = scmp.eq.s32.totalorder %s23, 7
      %p104 = por %p102, %p103
      %p105 = scmp.ne.s32.totalorder %s96, %s97
      %p106 = scmp.eq.s32.totalorder %s23, 0
      %p107 = por %p105, %p106
      %p108 = scmp.ne.s32.totalorder %s96, %s97
      %p109 = scmp.eq.s32.totalorder %s24, 7
      %p110 = por %p108, %p109
      %p112 = scmp.ne.s32.totalorder %s97, %s111
      %p113 = scmp.eq.s32.totalorder %s24, 0
      %p114 = por %p112, %p113
      %s115 = ssub.s32 %s18, %s25
      %p116 = scmp.eq.s32.totalorder %s115, 0
      %s118 = sadd.s32 %s117, 1
      %s119 = scalar_select %p116, %s117, %s118
      %p122 = pneg %p116
      %p123 = scmp.eq.s32.totalorder %s18, 7
      %p124 = por %p122, %p123
      %p125 = scmp.ne.s32.totalorder %s117, %s120
      %p126 = scmp.eq.s32.totalorder %s18, 0
      %p127 = por %p125, %p126
      %p128 = scmp.ne.s32.totalorder %s117, %s120
      %p129 = scmp.eq.s32.totalorder %s23, 7
      %p130 = por %p128, %p129
      %p131 = scmp.ne.s32.totalorder %s120, %s121
      %p132 = scmp.eq.s32.totalorder %s23, 0
      %p133 = por %p131, %p132
      %p134 = scmp.ne.s32.totalorder %s120, %s121
      %p135 = scmp.eq.s32.totalorder %s24, 7
      %p136 = por %p134, %p135
      %p138 = scmp.ne.s32.totalorder %s121, %s137
      %p139 = scmp.eq.s32.totalorder %s24, 0
      %p140 = por %p138, %p139
      %s142 = sadd.s32 %s141, 1
      %p145 = scmp.eq.s32.totalorder %s18, 7
      %p146 = scmp.ne.s32.totalorder %s141, %s143
      %p147 = scmp.eq.s32.totalorder %s18, 0
      %p148 = por %p146, %p147
      %p149 = scmp.ne.s32.totalorder %s141, %s143
      %p150 = scmp.eq.s32.totalorder %s23, 7
      %p151 = por %p149, %p150
      %p152 = scmp.ne.s32.totalorder %s143, %s144
      %p153 = scmp.eq.s32.totalorder %s23, 0
      %p154 = por %p152, %p153
      %p155 = scmp.ne.s32.totalorder %s143, %s144
      %p156 = scmp.eq.s32.totalorder %s24, 7
      %p157 = por %p155, %p156
      %p159 = scmp.ne.s32.totalorder %s144, %s158
      %p160 = scmp.eq.s32.totalorder %s24, 0
      %p161 = por %p159, %p160
      %p162 = scmp.le.s32.totalorder 1, %s18
      %p163 = scmp.lt.s32.totalorder %s18, 9
      %p164 = pnand %p162, %p163
      %p165 = pneg %p164
      // Predicated region
      $region9: #{tpu_custom_call.1} parent=5 // pred_check
        _
      $region10: #{tpu_custom_call.1} parent=5 // pred_check_branch
        %167 = sbr.rel (%p164) target = $region12
      $region11: #{tpu_custom_call.1} parent=5 // pred_region
        %s168 = ssub.s32 %s18, 1
        // Predicated region
        $region13: #{tpu_custom_call.1} parent=11 // pred_check
          %p169 = pneg %p65
        $region14: #{tpu_custom_call.1} parent=11 // pred_check_branch
          %171 = sbr.rel (%p169) target = $region16
        $region15: #{tpu_custom_call.1} parent=11 // pred_region
          %173 = vsyncadd [#allocation3], 0
          %s174 = sshll.u32 %s1, 4
          %s175 = int_to_ptr.hbm [resolvable:$true] %s174
          %s176 = sshll.u32 [#allocation2], 4
          %s177 = int_to_ptr.vmem [resolvable:$true] %s176
          %182 = dma.hbm_to_vmem [thread:$0]  %s175, 1536, %s177, [#allocation3], 64, 64, 4
        $region16: #{tpu_custom_call.1} parent=11 // pred_fallthru
          _
        // Predicated region
        $region17: #{tpu_custom_call.1} parent=11 // pred_check
          %p183 = pneg %p86
        $region18: #{tpu_custom_call.1} parent=11 // pred_check_branch
          %185 = sbr.rel (%p183) target = $region20
        $region19: #{tpu_custom_call.1} parent=11 // pred_region
          %187 = vsyncadd [#allocation6], 0
          %s188 = sshll.u32 %s2, 4
          %s189 = int_to_ptr.hbm [resolvable:$true] %s188
          %s190 = sshll.u32 [#allocation5], 4
          %s191 = int_to_ptr.vmem [resolvable:$true] %s190
          %196 = dma.hbm_to_vmem [thread:$0]  %s189, 48, %s191, [#allocation6], 16, 16, 1
        $region20: #{tpu_custom_call.1} parent=11 // pred_fallthru
          _
        // Predicated region
        $region21: #{tpu_custom_call.1} parent=11 // pred_check
          %p197 = pneg %p107
        $region22: #{tpu_custom_call.1} parent=11 // pred_check_branch
          %199 = sbr.rel (%p197) target = $region24
        $region23: #{tpu_custom_call.1} parent=11 // pred_region
          %201 = vsyncadd [#allocation6], 0
          %s203 = sshll.u32 %s3, 4
          %s204 = int_to_ptr.hbm [resolvable:$true] %s203
          %s205 = sshll.u32 [#allocation7], 4
          %s206 = int_to_ptr.vmem [resolvable:$true] %s205
          %208 = dma.hbm_to_vmem [thread:$0]  %s204, 64, %s206, [#allocation6]
        $region24: #{tpu_custom_call.1} parent=11 // pred_fallthru
          _
      $region12: #{tpu_custom_call.1} parent=5 // pred_fallthru
        _
      %p209 = scmp.lt.s32.totalorder %s18, 8
      // Predicated region
      $region25: #{tpu_custom_call.1} parent=5 // pred_check
        %p210 = pneg %p209
      $region26: #{tpu_custom_call.1} parent=5 // pred_check_branch
        %212 = sbr.rel (%p210) target = $region28
      $region27: #{tpu_custom_call.1} parent=5 // pred_region
        // Predicated region
        $region29: #{tpu_custom_call.1} parent=27 // pred_check
          %p213 = pneg %p38
        $region30: #{tpu_custom_call.1} parent=27 // pred_check_branch
          %215 = sbr.rel (%p213) target = $region32
        $region31: #{tpu_custom_call.1} parent=27 // pred_region
          %p216 = scmp.lt.s32.totalorder %s18, 7
          %s217 = scalar_select %p216, %s18, 7
          %s218 = scalar_lea.vmem %s0, %s217
        $region32: #{tpu_custom_call.1} parent=27 // pred_fallthru
          _
      $region28: #{tpu_custom_call.1} parent=5 // pred_fallthru
        _
      %p219 = scmp.le.s32.totalorder 1, %s18
      %p220 = scmp.lt.s32.totalorder %s18, 9
      %p221 = pnand %p219, %p220
      %p222 = pneg %p221
      // Predicated region
      $region33: #{tpu_custom_call.1} parent=5 // pred_check
        _
      $region34: #{tpu_custom_call.1} parent=5 // pred_check_branch
        %224 = sbr.rel (%p221) target = $region36
      $region35: #{tpu_custom_call.1} parent=5 // pred_region
        %s225 = ssub.s32 %s18, 1
        // Predicated region
        $region37: #{tpu_custom_call.1} parent=35 // pred_check
          %p226 = pneg %p65
        $region38: #{tpu_custom_call.1} parent=35 // pred_check_branch
          %228 = sbr.rel (%p226) target = $region40
        $region39: #{tpu_custom_call.1} parent=35 // pred_region
          %230 = dma.done [#allocation3], 1536
        $region40: #{tpu_custom_call.1} parent=35 // pred_fallthru
          _
        // Predicated region
        $region41: #{tpu_custom_call.1} parent=35 // pred_check
          %p231 = pneg %p86
        $region42: #{tpu_custom_call.1} parent=35 // pred_check_branch
          %233 = sbr.rel (%p231) target = $region44
        $region43: #{tpu_custom_call.1} parent=35 // pred_region
          %235 = dma.done [#allocation6], 48
        $region44: #{tpu_custom_call.1} parent=35 // pred_fallthru
          _
        // Predicated region
        $region45: #{tpu_custom_call.1} parent=35 // pred_check
          %p236 = pneg %p107
        $region46: #{tpu_custom_call.1} parent=35 // pred_check_branch
          %238 = sbr.rel (%p236) target = $region48
        $region47: #{tpu_custom_call.1} parent=35 // pred_region
          %240 = dma.done [#allocation6], 64
        $region48: #{tpu_custom_call.1} parent=35 // pred_fallthru
          _
        %p241 = scmp.lt.s32.totalorder %s23, 7
        %s242 = scalar_select %p241, %s23, 7
        %s243 = scalar_lea.vmem %s0, %s242
        %p244 = pneg %p44
        %p245 = pneg %p41
        %p246 = pneg %p65
        %p247 = pneg %p62
        %p248 = pneg %p86
        %p249 = pneg %p83
        %p250 = pneg %p107
        %p251 = pneg %p104
        %p252 = pneg %p133
        %p253 = pneg %p130
        %s254 = sand.u32 %s120, 1
        %s255 = scalar_lea.sflag [#allocation4], %s254
        %s256 = sand.u32 %s120, 1
        %s257 = scalar_lea.vmem [#allocation8], %s256
        %p258 = pneg %p154
        %p259 = pneg %p151
        %p260 = scmp.lt.s32.totalorder %s23, 7
        %s261 = scalar_select %p260, %s23, 7
        %s262 = scalar_lea.vmem %s0, %s261
        %p264 = scmp.eq.s32.totalorder %s23, 0
        // Predicated region
        $region49: #{tpu_custom_call.1} parent=35 // pred_check
          %p265 = pneg %p264
        $region50: #{tpu_custom_call.1} parent=35 // pred_check_branch
          %267 = sbr.rel (%p265) target = $region52
        $region51: #{tpu_custom_call.1} parent=35 // pred_region
          %v268 = vld [vmem:[#allocation7] sm:$0xf]
          %vm269 = vcmask 257024
          %270 = vst.msk [vmem:[#allocation9] sm:$0xf] %vm269, %v268
        $region52: #{tpu_custom_call.1} parent=35 // pred_fallthru
          _
        %v271 = vld [vmem:[%s262] sm:$0x1]
        %v272 = vpack.c.bf16 %v271, %v271
        %v273 = vld [vmem:[#allocation2] sm:$0xf]
        %v274 = vld [vmem:[#allocation2 + $0x4] sm:$0xf]
        %v275 = vld [vmem:[#allocation2 + $0x8] sm:$0xf]
        %v276 = vld [vmem:[#allocation2 + $0xc] sm:$0xf]
        %v277 = vld [vmem:[#allocation2 + $0x10] sm:$0xf]
        %v278 = vld [vmem:[#allocation2 + $0x14] sm:$0xf]
        %v279 = vld [vmem:[#allocation2 + $0x18] sm:$0xf]
        %v280 = vld [vmem:[#allocation2 + $0x1c] sm:$0xf]
        %v289 = vunpack.c.l.b16 %v273
        %v290 = vunpack.c.l.b16 %v274
        %v291 = vunpack.c.l.b16 %v275
        %v292 = vunpack.c.l.b16 %v276
        %v293 = vunpack.c.l.b16 %v277
        %v294 = vunpack.c.l.b16 %v278
        %v295 = vunpack.c.l.b16 %v279
        %v296 = vunpack.c.l.b16 %v280
        %v297 = vpack.c.b16 %v290, %v289
        %v298 = vpack.c.b16 %v292, %v291
        %v299 = vpack.c.b16 %v294, %v293
        %v300 = vpack.c.b16 %v296, %v295
        %vm305 = vcmask 523264
        %v307 = vsel %vm305, %v272, 0
        %309 = vmatpush.bf16.msra.mxu0 0
        %310 = vmatpush.bf16.msra.mxu0 0
        %311 = vmatpush.bf16.msra.mxu0 0
        %312 = vmatpush.bf16.msra.mxu0 0
        %313 = vmatpush.bf16.msra.mxu0 %v300
        %314 = vmatpush.bf16.msra.mxu0 %v299
        %315 = vmatpush.bf16.msra.mxu0 %v298
        %316 = vmatpush.bf16.msra.mxu0 %v297
        %317 = vmatmul.bf16.gmra.mxu0 %v307
        %v318 = vpop.f32.mrf.mxu0
        %v319 = vadd.f32 0.0, %v318
        %v320 = vpop.f32.mrf.mxu0
        %321 = vdwg.mxu0
        %v322 = vld [vmem:[#allocation5] sm:$0x1]
        %v323 = vadd.f32 %v319, %v322
        %v324 = vld [vmem:[#allocation9] sm:$0x1]
        %v325 = vld [vmem:[#allocation9 + $0x1] sm:$0x1]
        %327 = vrot.lane.b32.xlu0 %v324, 32
        %v328 = vpop.permute.xlu0 %327
        %vm330 = vcmask 261120
        %v331 = vsel %vm330, %v323, %v328
        %v332 = vpack.c.bf16 %v331, %v331
        %s333 = scalar_lea.vmem [#allocation2], 32
        %v334 = vld [vmem:[%s333] sm:$0xf]
        %v335 = vld [vmem:[%s333 + $0x4] sm:$0xf]
        %v336 = vld [vmem:[%s333 + $0x8] sm:$0xf]
        %v337 = vld [vmem:[%s333 + $0xc] sm:$0xf]
        %v338 = vld [vmem:[%s333 + $0x10] sm:$0xf]
        %v339 = vld [vmem:[%s333 + $0x14] sm:$0xf]
        %v340 = vld [vmem:[%s333 + $0x18] sm:$0xf]
        %v341 = vld [vmem:[%s333 + $0x1c] sm:$0xf]
        %s342 = scalar_lea.vmem [#allocation5], 1
        %v343 = vld [vmem:[%s342] sm:$0x1]
        %v352 = vunpack.c.l.b16 %v334
        %v353 = vunpack.c.l.b16 %v335
        %v354 = vunpack.c.l.b16 %v336
        %v355 = vunpack.c.l.b16 %v337
        %v356 = vunpack.c.l.b16 %v338
        %v357 = vunpack.c.l.b16 %v339
        %v358 = vunpack.c.l.b16 %v340
        %v359 = vunpack.c.l.b16 %v341
        %v360 = vpack.c.b16 %v353, %v352
        %v361 = vpack.c.b16 %v355, %v354
        %v362 = vpack.c.b16 %v357, %v356
        %v363 = vpack.c.b16 %v359, %v358
        %v369 = vsel %vm305, %v332, 0
        %371 = vmatpush.bf16.msra.mxu0 0
        %372 = vmatpush.bf16.msra.mxu0 0
        %373 = vmatpush.bf16.msra.mxu0 0
        %374 = vmatpush.bf16.msra.mxu0 0
        %375 = vmatpush.bf16.msra.mxu0 %v363
        %376 = vmatpush.bf16.msra.mxu0 %v362
        %377 = vmatpush.bf16.msra.mxu0 %v361
        %378 = vmatpush.bf16.msra.mxu0 %v360
        %379 = vmatmul.bf16.gmra.mxu0 %v369
        %v380 = vpop.f32.mrf.mxu0
        %v381 = vadd.f32 %v343, %v380
        %v382 = vpop.f32.mrf.mxu0
        %383 = vdwg.mxu0
        %v384 = vxor.u32 %v381, 2147483648
        %v385 = vmul.f32 %v384, 1.442695
        %v386 = vpow.pop %v385
        %v387 = vadd.f32 %v386, 1.0
        %v388 = vrcp.pop %v387
        %v389 = vmul.f32 %v387, %v388
        %v390 = vsub.f32 1.0, %v389
        %v391 = vmul.f32 %v388, %v390
        %v392 = vadd.f32 %v388, %v391
        %vm393 = vweird.f32 %v387
        %vm394 = vweird.f32 %v388
        %vm395 = vmor %vm393, %vm394
        %v396 = vsel %vm395, %v388, %v392
        %v397 = vand.u32 2147483647, %v387
        %vm398 = vcmp.eq.f32.partialorder %v397, 8.507059e+37
        %v399 = vand.u32 %v387, 2147483648
        %v400 = vor.u32 1.1754944e-38, %v399
        %v401 = vsel %vm398, %v400, %v396
        %v402 = vmul.f32 1.0, %v401
        %v403 = vtanh.pop %v381
        %405 = vrot.lane.b32.xlu0 %v325, 32
        %v406 = vpop.permute.xlu0 %405
        %v408 = vmul.f32 %v402, %v406
        %410 = vrot.lane.b32.xlu0 %v403, 64
        %v411 = vpop.permute.xlu0 %410
        %v413 = vmul.f32 %v402, %v411
        %415 = vrot.lane.b32.xlu0 %v413, 32
        %v416 = vpop.permute.xlu0 %415
        %v418 = vadd.f32 %v408, %v416
        %v419 = vtanh.pop %v418
        %421 = vrot.lane.b32.xlu0 %v419, 64
        %v422 = vpop.permute.xlu0 %421
        %v424 = vmul.f32 %v402, %v422
        %426 = vrot.lane.b32.xlu0 %v424, 32
        %v427 = vpop.permute.xlu0 %426
        %vm429 = vcmask 253952
        %430 = vst.msk [vmem:[#allocation9] sm:$0x1] %vm429, %v427
        %432 = vrot.lane.b32.xlu0 %v418, 96
        %v433 = vpop.permute.xlu0 %432
        %435 = vst.msk [vmem:[#allocation9 + $0x1] sm:$0x1] %vm429, %v433
        %v436 = vld [vmem:[#allocation9 + $0x2] sm:$0x1]
        %v437 = vld [vmem:[#allocation9 + $0x3] sm:$0x1]
        %439 = vrot.lane.b32.xlu0 %v436, 32
        %v440 = vpop.permute.xlu0 %439
        %v442 = vsel %vm330, %v427, %v440
        %v443 = vpack.c.bf16 %v442, %v442
        %s444 = scalar_lea.vmem [#allocation2], 64
        %v445 = vld [vmem:[%s444] sm:$0xf]
        %v446 = vld [vmem:[%s444 + $0x4] sm:$0xf]
        %v447 = vld [vmem:[%s444 + $0x8] sm:$0xf]
        %v448 = vld [vmem:[%s444 + $0xc] sm:$0xf]
        %v449 = vld [vmem:[%s444 + $0x10] sm:$0xf]
        %v450 = vld [vmem:[%s444 + $0x14] sm:$0xf]
        %v451 = vld [vmem:[%s444 + $0x18] sm:$0xf]
        %v452 = vld [vmem:[%s444 + $0x1c] sm:$0xf]
        %s453 = scalar_lea.vmem [#allocation5], 2
        %v454 = vld [vmem:[%s453] sm:$0x1]
        %v463 = vunpack.c.l.b16 %v445
        %v464 = vunpack.c.l.b16 %v446
        %v465 = vunpack.c.l.b16 %v447
        %v466 = vunpack.c.l.b16 %v448
        %v467 = vunpack.c.l.b16 %v449
        %v468 = vunpack.c.l.b16 %v450
        %v469 = vunpack.c.l.b16 %v451
        %v470 = vunpack.c.l.b16 %v452
        %v471 = vpack.c.b16 %v464, %v463
        %v472 = vpack.c.b16 %v466, %v465
        %v473 = vpack.c.b16 %v468, %v467
        %v474 = vpack.c.b16 %v470, %v469
        %v480 = vsel %vm305, %v443, 0
        %482 = vmatpush.bf16.msra.mxu0 0
        %483 = vmatpush.bf16.msra.mxu0 0
        %484 = vmatpush.bf16.msra.mxu0 0
        %485 = vmatpush.bf16.msra.mxu0 0
        %486 = vmatpush.bf16.msra.mxu0 %v474
        %487 = vmatpush.bf16.msra.mxu0 %v473
        %488 = vmatpush.bf16.msra.mxu0 %v472
        %489 = vmatpush.bf16.msra.mxu0 %v471
        %490 = vmatmul.bf16.gmra.mxu0 %v480
        %v491 = vpop.f32.mrf.mxu0
        %v492 = vadd.f32 %v454, %v491
        %v493 = vpop.f32.mrf.mxu0
        %494 = vdwg.mxu0
        %v495 = vxor.u32 %v492, 2147483648
        %v496 = vmul.f32 %v495, 1.442695
        %v497 = vpow.pop %v496
        %v498 = vadd.f32 %v497, 1.0
        %v499 = vrcp.pop %v498
        %v500 = vmul.f32 %v498, %v499
        %v501 = vsub.f32 1.0, %v500
        %v502 = vmul.f32 %v499, %v501
        %v503 = vadd.f32 %v499, %v502
        %vm504 = vweird.f32 %v498
        %vm505 = vweird.f32 %v499
        %vm506 = vmor %vm504, %vm505
        %v507 = vsel %vm506, %v499, %v503
        %v508 = vand.u32 2147483647, %v498
        %vm509 = vcmp.eq.f32.partialorder %v508, 8.507059e+37
        %v510 = vand.u32 %v498, 2147483648
        %v511 = vor.u32 1.1754944e-38, %v510
        %v512 = vsel %vm509, %v511, %v507
        %v513 = vmul.f32 1.0, %v512
        %v514 = vtanh.pop %v492
        %516 = vrot.lane.b32.xlu0 %v437, 32
        %v517 = vpop.permute.xlu0 %516
        %v519 = vmul.f32 %v513, %v517
        %521 = vrot.lane.b32.xlu0 %v514, 64
        %v522 = vpop.permute.xlu0 %521
        %v524 = vmul.f32 %v513, %v522
        %526 = vrot.lane.b32.xlu0 %v524, 32
        %v527 = vpop.permute.xlu0 %526
        %v529 = vadd.f32 %v519, %v527
        %v530 = vtanh.pop %v529
        %532 = vrot.lane.b32.xlu0 %v530, 64
        %v533 = vpop.permute.xlu0 %532
        %v535 = vmul.f32 %v513, %v533
        %537 = vrot.lane.b32.xlu0 %v535, 32
        %v538 = vpop.permute.xlu0 %537
        %540 = vst.msk [vmem:[#allocation9 + $0x2] sm:$0x1] %vm429, %v538
        %542 = vrot.lane.b32.xlu0 %v529, 96
        %v543 = vpop.permute.xlu0 %542
        %545 = vst.msk [vmem:[#allocation9 + $0x3] sm:$0x1] %vm429, %v543
        %546 = vst.msk [vmem:[%s257] sm:$0x1] %vm429, %v538
        %s547 = sand.u32 %s120, 1
        %s548 = scalar_lea.sflag [#allocation4], %s547
        %s549 = sand.u32 %s120, 1
        %s550 = scalar_lea.vmem [#allocation8], %s549
        // Predicated region
        $region53: #{tpu_custom_call.1} parent=35 // pred_check
          %p551 = pneg %p130
        $region54: #{tpu_custom_call.1} parent=35 // pred_check_branch
          %553 = sbr.rel (%p551) target = $region56
        $region55: #{tpu_custom_call.1} parent=35 // pred_region
          %555 = vsyncadd %s548, 0
          %s556 = scalar_lea.hbm %s4, %s23
          %s558 = sshll.u32 %s550, 4
          %s559 = int_to_ptr.vmem [resolvable:$true] %s558
          %s560 = sshll.u32 %s556, 4
          %s561 = int_to_ptr.hbm [resolvable:$true] %s560
          %563 = dma.vmem_to_hbm [thread:$0]  %s559, 16, %s561, %s548
        $region56: #{tpu_custom_call.1} parent=35 // pred_fallthru
          _
        // Predicated region
        $region57: #{tpu_custom_call.1} parent=35 // pred_check
          %p564 = pneg %p151
        $region58: #{tpu_custom_call.1} parent=35 // pred_check_branch
          %566 = sbr.rel (%p564) target = $region60
        $region59: #{tpu_custom_call.1} parent=35 // pred_region
          %568 = vsyncadd [#allocation10], 0
          %s570 = sshll.u32 [#allocation9], 4
          %s571 = int_to_ptr.vmem [resolvable:$true] %s570
          %s572 = sshll.u32 %s5, 4
          %s573 = int_to_ptr.hbm [resolvable:$true] %s572
          %575 = dma.vmem_to_hbm [thread:$0]  %s571, 64, %s573, [#allocation10]
        $region60: #{tpu_custom_call.1} parent=35 // pred_fallthru
          _
        // Predicated region
        $region61: #{tpu_custom_call.1} parent=35 // pred_check
          %p576 = pneg %p151
        $region62: #{tpu_custom_call.1} parent=35 // pred_check_branch
          %578 = sbr.rel (%p576) target = $region64
        $region63: #{tpu_custom_call.1} parent=35 // pred_region
          %580 = dma.done [#allocation10], 64
        $region64: #{tpu_custom_call.1} parent=35 // pred_fallthru
          _
      $region36: #{tpu_custom_call.1} parent=5 // pred_fallthru
        _
      %p581 = scmp.le.s32.totalorder 2, %s18
      // Predicated region
      $region65: #{tpu_custom_call.1} parent=5 // pred_check
        %p582 = pneg %p581
      $region66: #{tpu_custom_call.1} parent=5 // pred_check_branch
        %584 = sbr.rel (%p582) target = $region68
      $region67: #{tpu_custom_call.1} parent=5 // pred_region
        %s585 = ssub.s32 %s18, 2
        // Predicated region
        $region69: #{tpu_custom_call.1} parent=67 // pred_check
          %p586 = pneg %p136
        $region70: #{tpu_custom_call.1} parent=67 // pred_check_branch
          %588 = sbr.rel (%p586) target = $region72
        $region71: #{tpu_custom_call.1} parent=67 // pred_region
          %s589 = sand.u32 %s121, 1
          %s590 = scalar_lea.sflag [#allocation4], %s589
          %s591 = sand.u32 %s121, 1
          %s592 = scalar_lea.vmem [#allocation8], %s591
          %594 = dma.done %s590, 16
        $region72: #{tpu_custom_call.1} parent=67 // pred_fallthru
          _
      $region68: #{tpu_custom_call.1} parent=5 // pred_fallthru
        _
    $region6: #{tpu_custom_call.1} parent=1 // loop_footer
      %s22 = sadd.s32 1, %s18
    $region7: #{tpu_custom_call.1} parent=1 // loop_footer_branch
      %17 = sbr.rel target = $region3
    $region8: #{tpu_custom_call.1} parent=1 // loop_exit
      _
    %595 = vsyncpa [#allocation3], 1
    %s596 = scalar_lea.sflag [#allocation3], 1
    %597 = vsyncpa %s596, 1
    %598 = vsyncpa [#allocation6], 1
    %599 = vsyncpa [#allocation4], 1
    %s600 = scalar_lea.sflag [#allocation4], 1
    %601 = vsyncpa %s600, 1
    %602 = vsyncpa [#allocation10], 1

</llo_original>
